<compile_context>
chip_gen: v7x
topology: tpu7x:2x2x1
jax: 0.10.0
libtpu: 0.0.40
codegen_flags: <defaults>
</compile_context>

<pallas_src>
import jax
import jax.numpy as jnp
from jax.experimental import pallas as pl
from jax.experimental.pallas import tpu as pltpu

LANE = 128
_MIB = 1024 * 1024


def _round_up(n, m):
    return ((n + m - 1) // m) * m


def _mlp_kernel(x_ref, w1_ref, b1_ref, w2_ref, b2_ref, y_ref, acc_ref):
    """One (batch-tile, hidden-chunk) grid step of y = sigmoid(x@W1+b1)@W2+b2."""
    c = pl.program_id(1)

    @pl.when(c == 0)
    def _init():
        acc_ref[...] = jnp.zeros_like(acc_ref)

    # Layer 1: f32 x is cast to bf16 on the VPU (hidden under the MXU); f32 acc.
    h = jnp.dot(x_ref[...].astype(jnp.bfloat16), w1_ref[...],
                preferred_element_type=jnp.float32)
    # Sigmoid via a single EUP transcendental (exact identity; cheap VPU fma).
    h = 0.5 * jnp.tanh(0.5 * (h + b1_ref[...])) + 0.5
    # Layer 2 partial product for this hidden chunk, accumulated in f32.
    acc_ref[...] += jnp.dot(h.astype(jnp.bfloat16), w2_ref[...],
                            preferred_element_type=jnp.float32)

    @pl.when(c == pl.num_programs(1) - 1)
    def _finalize():
        y_ref[...] = (acc_ref[...] + b2_ref[...]).astype(y_ref.dtype)


def prepare_params(w1, b1, w2, b2):
    """Pad feature dims to 128-lane multiples and cast weights to bf16, ONCE.

    w1: (I, H), b1: (1, H) or (H,), w2: (H, O), b2: (1, O) or (O,).
    Zero-padded W2 rows are what cancel the sigmoid(0)=0.5 values produced in
    padded hidden lanes -- keep them zero.
    """
    I, H = w1.shape
    O = w2.shape[1]
    Hp = _round_up(H, LANE)
    Op = _round_up(O, LANE)
    w1_p = jnp.zeros((I, Hp), jnp.bfloat16).at[:, :H].set(w1.astype(jnp.bfloat16))
    b1_p = jnp.zeros((1, Hp), jnp.float32).at[:, :H].set(
        b1.reshape(1, H).astype(jnp.float32))
    w2_p = jnp.zeros((Hp, Op), jnp.bfloat16).at[:H, :O].set(w2.astype(jnp.bfloat16))
    b2_p = jnp.zeros((1, Op), jnp.float32).at[:, :O].set(
        b2.reshape(1, O).astype(jnp.float32))
    return {"w1": w1_p, "b1": b1_p, "w2": w2_p, "b2": b2_p, "out_features": O}


def _auto_hidden_block(I, Hp, Op, budget_bytes):
    """Whole Hp (resident weights) if it fits, else the largest 128-multiple
    divisor of Hp whose double-buffered W1/W2 chunk pair fits the budget."""
    if (I * Hp + Hp * Op) * 2 <= budget_bytes:
        return Hp
    n = Hp // LANE
    for d in range(n, 0, -1):
        th = d * LANE
        if n % d == 0 and 2 * (I * th + th * Op) * 2 <= budget_bytes:
            return th
    return LANE


def net_forward(x, params, *, block_b=256, hidden_block=None,
                resident_weight_budget=24 * _MIB):
    """Forward pass of Net.  x: (B, I) f32; params from prepare_params()."""
    w1_p, b1_p, w2_p, b2_p = params["w1"], params["b1"], params["w2"], params["b2"]
    O = params["out_features"]

    x = x.astype(jnp.float32)
    B, I = x.shape
    I_w, Hp = w1_p.shape
    Op = w2_p.shape[1]
    assert I == I_w, "input feature mismatch"

    # Batch tile: multiple of 16 (bf16 sublane pack); no need to pad a tiny
    # batch all the way to 128 MXU rows (rows stream through the MXU).
    TB = min(_round_up(block_b, 16), _round_up(B, 16))
    Bp = _round_up(B, TB)
    if Bp != B:
        x = jnp.zeros((Bp, I), jnp.float32).at[:B, :].set(x)

    # Hidden-dim chunking: single resident chunk when the weights fit VMEM,
    # otherwise stream 128-multiple chunks (keeps v7x's 64 MiB/TC happy).
    TH = hidden_block if hidden_block is not None else _auto_hidden_block(
        I, Hp, Op, resident_weight_budget)
    assert Hp % TH == 0 and TH % LANE == 0
    n_chunks = Hp // TH
    grid = (Bp // TB, n_chunks)

    # Explicit scoped-VMEM limit from the actual footprint (defaults are only
    # 16 MiB on v5e / 32 MiB on v6e,v7x); cap at 64 MiB (v7x physical).
    weight_tile_bytes = (I * TH + TH * Op) * 2 + (TH + Op) * 4
    weight_bufs = 1 if n_chunks == 1 else 2
    est = (weight_bufs * weight_tile_bytes
           + 2 * TB * I * 4          # double-buffered x tiles (f32)
           + 2 * TB * Op * 4         # double-buffered y tiles (f32)
           + TB * Op * 4             # accumulator scratch
           + TB * TH * (4 + 2))      # h intermediate (f32 + bf16 copy)
    vmem_limit = int(min(64 * _MIB, max(32 * _MIB, 1.5 * est)))

    cost = pl.CostEstimate(
        flops=2 * Bp * (I * Hp + Hp * Op),
        transcendentals=Bp * Hp,   # one tanh per hidden element
        bytes_accessed=(Bp * I * 4 + (I * Hp + Hp * Op) * 2
                        + (Hp + Op) * 4 + Bp * Op * 4),
    )

    def build(single_buffer_consts):
        # Constant-index operands: single-buffer to halve their VMEM footprint.
        const_kw = dict(pipeline_mode=pl.Buffered(1)) if single_buffer_consts else {}
        # Streamed weight chunks (n_chunks > 1) keep default double buffering.
        wkw = const_kw if n_chunks == 1 else {}
        in_specs = [
            pl.BlockSpec((TB, I), lambda i, c: (i, 0)),            # x tile
            pl.BlockSpec((I, TH), lambda i, c: (0, c), **wkw),     # W1 chunk
            pl.BlockSpec((1, TH), lambda i, c: (0, c), **wkw),     # b1 chunk
            pl.BlockSpec((TH, Op), lambda i, c: (c, 0), **wkw),    # W2 chunk
            pl.BlockSpec((1, Op), lambda i, c: (0, 0), **const_kw),  # b2
        ]
        return pl.pallas_call(
            _mlp_kernel,
            out_shape=jax.ShapeDtypeStruct((Bp, Op), jnp.float32),
            grid=grid,
            in_specs=in_specs,
            out_specs=pl.BlockSpec((TB, Op), lambda i, c: (i, 0)),
            scratch_shapes=[pltpu.VMEM((TB, Op), jnp.float32)],
            compiler_params=pltpu.CompilerParams(
                dimension_semantics=("parallel", "arbitrary"),
                vmem_limit_bytes=vmem_limit),
            cost_estimate=cost,
        )

    try:
        y_p = build(True)(x, w1_p, b1_p, w2_p, b2_p)
    except Exception:
        # Fallback for JAX versions without single-buffer pipeline_mode support.
        y_p = build(False)(x, w1_p, b1_p, w2_p, b2_p)

    return y_p[:B, :O]


def init_params(key, input_sz, hidden_sz, out_sz, dtype=jnp.float32):
    """PyTorch nn.Linear-style init, U[-1/sqrt(fan_in), 1/sqrt(fan_in)].

    Weights are returned already transposed to (in_features, out_features).
    """
    k1, k2, k3, k4 = jax.random.split(key, 4)
    bound1 = 1.0 / jnp.sqrt(jnp.float32(input_sz))
    bound2 = 1.0 / jnp.sqrt(jnp.float32(hidden_sz))
    w1 = jax.random.uniform(k1, (input_sz, hidden_sz), dtype, -bound1, bound1)
    b1 = jax.random.uniform(k2, (1, hidden_sz), dtype, -bound1, bound1)
    w2 = jax.random.uniform(k3, (hidden_sz, out_sz), dtype, -bound2, bound2)
    b2 = jax.random.uniform(k4, (1, out_sz), dtype, -bound2, bound2)
    return w1, b1, w2, b2


if __name__ == "__main__":
    # Small shapes consistent with the module's forward pass.
    batch, input_sz, hidden_sz, out_sz = 8, 32, 64, 16

    key = jax.random.PRNGKey(0)
    kx, kp = jax.random.split(key)
    x = jax.random.normal(kx, (batch, input_sz), jnp.float32)
    w1, b1, w2, b2 = init_params(kp, input_sz, hidden_sz, out_sz)
    params = prepare_params(w1, b1, w2, b2)   # pad + cast ONCE

    y = jax.block_until_ready(net_forward(x, params))
    y_ref = jax.nn.sigmoid(x @ w1 + b1) @ w2 + b2   # pure-JAX f32 reference
    assert y.shape == (batch, out_sz)
    assert jnp.allclose(y, y_ref, atol=3e-2, rtol=3e-2), (
        float(jnp.max(jnp.abs(y - y_ref))))

    # Also exercise the hidden-chunked (streamed-weight) path: Hp=256, TH=128.
    w1b, b1b, w2b, b2b = init_params(kp, input_sz, 192, out_sz)
    params2 = prepare_params(w1b, b1b, w2b, b2b)
    y2 = jax.block_until_ready(net_forward(x, params2, hidden_block=128))
    y2_ref = jax.nn.sigmoid(x @ w1b + b1b) @ w2b + b2b
    assert y2.shape == (batch, out_sz)
    assert jnp.allclose(y2, y2_ref, atol=3e-2, rtol=3e-2), (
        float(jnp.max(jnp.abs(y2 - y2_ref))))

    print("KERNEL_OK")
</pallas_src>

<mosaic_0001>
module attributes {stable_mosaic.version = 11 : i64} {
  func.func @_mlp_kernel(%arg0: i32, %arg1: i32, %arg2: memref<16x32xf32, #tpu.memory_space<vmem>>, %arg3: memref<32x128xbf16, #tpu.memory_space<vmem>>, %arg4: memref<1x128xf32, #tpu.memory_space<vmem>>, %arg5: memref<128x128xbf16, #tpu.memory_space<vmem>>, %arg6: memref<1x128xf32, #tpu.memory_space<vmem>>, %arg7: memref<16x128xf32, #tpu.memory_space<vmem>>, %arg8: memref<16x128xf32, #tpu.memory_space<vmem>>) attributes {dimension_semantics = [#tpu.dimension_semantics<parallel>, #tpu.dimension_semantics<arbitrary>], iteration_bounds = array<i64: 1, 1>, scalar_prefetch = 0 : i64, scratch_operands = 1 : i64, tpu.core_type = #tpu.core_type<tc>, window_params = [{transform_indices = @transform_0, window_bounds = array<i64: 16, 32>}, {pipeline_mode = #tpu.pipeline_mode<synchronous>, transform_indices = @transform_1, window_bounds = array<i64: 32, 128>}, {pipeline_mode = #tpu.pipeline_mode<synchronous>, transform_indices = @transform_2, window_bounds = array<i64: 1, 128>}, {pipeline_mode = #tpu.pipeline_mode<synchronous>, transform_indices = @transform_3, window_bounds = array<i64: 128, 128>}, {pipeline_mode = #tpu.pipeline_mode<synchronous>, transform_indices = @transform_4, window_bounds = array<i64: 1, 128>}, {transform_indices = @transform_5, window_bounds = array<i64: 16, 128>}]} {
    %c0_i32 = arith.constant 0 : i32
    %0 = arith.cmpi eq, %arg1, %c0_i32 : i32
    %1 = arith.extui %0 : i1 to i32
    %c0_i32_0 = arith.constant 0 : i32
    %2 = arith.cmpi ne, %1, %c0_i32_0 : i32
    scf.if %2 {
      %cst_18 = arith.constant 0.000000e+00 : f32
      %26 = vector.broadcast %cst_18 : f32 to vector<16x128xf32>
      %c0_19 = arith.constant 0 : index
      %c0_20 = arith.constant 0 : index
      %27 = vector.load %arg8[%c0_19, %c0_20] : memref<16x128xf32, #tpu.memory_space<vmem>>, vector<16x128xf32>
      tpu.vector_store %arg8[%c0_19, %c0_20], %26 {strides = array<i32>} : memref<16x128xf32, #tpu.memory_space<vmem>>, vector<16x128xf32>,
    } else {
    }
    %c0 = arith.constant 0 : index
    %c0_1 = arith.constant 0 : index
    %3 = vector.load %arg2[%c0, %c0_1] : memref<16x32xf32, #tpu.memory_space<vmem>>, vector<16x32xf32>
    %4 = arith.truncf %3 : vector<16x32xf32> to vector<16x32xbf16>
    %c0_2 = arith.constant 0 : index
    %c0_3 = arith.constant 0 : index
    %5 = vector.load %arg3[%c0_2, %c0_3] : memref<32x128xbf16, #tpu.memory_space<vmem>>, vector<32x128xbf16>
    %cst = arith.constant dense<0.000000e+00> : vector<16x128xf32>
    %6 = tpu.matmul %4, %5, %cst {dimension_numbers = #tpu.dot_dimension_numbers<[1], [0], [0], [1], [0, 0, 1, 1], [], []>} : vector<16x32xbf16>, vector<32x128xbf16>, vector<16x128xf32> -> vector<16x128xf32>
    %c0_4 = arith.constant 0 : index
    %c0_5 = arith.constant 0 : index
    %7 = vector.load %arg4[%c0_4, %c0_5] : memref<1x128xf32, #tpu.memory_space<vmem>>, vector<1x128xf32>
    %8 = vector.broadcast %7 : vector<1x128xf32> to vector<16x128xf32>
    %9 = arith.addf %6, %8 : vector<16x128xf32>
    %cst_6 = arith.constant 5.000000e-01 : f32
    %10 = vector.broadcast %cst_6 : f32 to vector<16x128xf32>
    %11 = arith.mulf %10, %9 : vector<16x128xf32>
    %12 = math.tanh %11 : vector<16x128xf32>
    %cst_7 = arith.constant 5.000000e-01 : f32
    %13 = vector.broadcast %cst_7 : f32 to vector<16x128xf32>
    %14 = arith.mulf %13, %12 : vector<16x128xf32>
    %cst_8 = arith.constant 5.000000e-01 : f32
    %15 = vector.broadcast %cst_8 : f32 to vector<16x128xf32>
    %16 = arith.addf %14, %15 : vector<16x128xf32>
    %c0_9 = arith.constant 0 : index
    %c0_10 = arith.constant 0 : index
    %17 = vector.load %arg8[%c0_9, %c0_10] : memref<16x128xf32, #tpu.memory_space<vmem>>, vector<16x128xf32>
    %18 = arith.truncf %16 : vector<16x128xf32> to vector<16x128xbf16>
    %c0_11 = arith.constant 0 : index
    %c0_12 = arith.constant 0 : index
    %19 = vector.load %arg5[%c0_11, %c0_12] : memref<128x128xbf16, #tpu.memory_space<vmem>>, vector<128x128xbf16>
    %cst_13 = arith.constant dense<0.000000e+00> : vector<16x128xf32>
    %20 = tpu.matmul %18, %19, %cst_13 {dimension_numbers = #tpu.dot_dimension_numbers<[1], [0], [0], [1], [0, 0, 1, 1], [], []>} : vector<16x128xbf16>, vector<128x128xbf16>, vector<16x128xf32> -> vector<16x128xf32>
    %21 = arith.addf %17, %20 : vector<16x128xf32>
    %c0_14 = arith.constant 0 : index
    %c0_15 = arith.constant 0 : index
    %22 = vector.load %arg8[%c0_14, %c0_15] : memref<16x128xf32, #tpu.memory_space<vmem>>, vector<16x128xf32>
    tpu.vector_store %arg8[%c0_14, %c0_15], %21 {strides = array<i32>} : memref<16x128xf32, #tpu.memory_space<vmem>>, vector<16x128xf32>,
    %c0_i32_16 = arith.constant 0 : i32
    %23 = arith.cmpi eq, %arg1, %c0_i32_16 : i32
    %24 = arith.extui %23 : i1 to i32
    %c0_i32_17 = arith.constant 0 : i32
    %25 = arith.cmpi ne, %24, %c0_i32_17 : i32
    scf.if %25 {
      %c0_18 = arith.constant 0 : index
      %c0_19 = arith.constant 0 : index
      %26 = vector.load %arg8[%c0_18, %c0_19] : memref<16x128xf32, #tpu.memory_space<vmem>>, vector<16x128xf32>
      %c0_20 = arith.constant 0 : index
      %c0_21 = arith.constant 0 : index
      %27 = vector.load %arg6[%c0_20, %c0_21] : memref<1x128xf32, #tpu.memory_space<vmem>>, vector<1x128xf32>
      %28 = vector.broadcast %27 : vector<1x128xf32> to vector<16x128xf32>
      %29 = arith.addf %26, %28 : vector<16x128xf32>
      %c0_22 = arith.constant 0 : index
      %c0_23 = arith.constant 0 : index
      %30 = vector.load %arg7[%c0_22, %c0_23] : memref<16x128xf32, #tpu.memory_space<vmem>>, vector<16x128xf32>
      tpu.vector_store %arg7[%c0_22, %c0_23], %29 {strides = array<i32>} : memref<16x128xf32, #tpu.memory_space<vmem>>, vector<16x128xf32>,
    } else {
    }
    return
  }
  func.func @transform_0(%arg0: i32, %arg1: i32) -> (i32, i32) {
    %c0_i32 = arith.constant 0 : i32
    %c0_i32_0 = arith.constant 0 : i32
    return %arg0, %c0_i32 : i32, i32
  }
  func.func @transform_1(%arg0: i32, %arg1: i32) -> (i32, i32) {
    %c0_i32 = arith.constant 0 : i32
    %c0_i32_0 = arith.constant 0 : i32
    return %c0_i32, %arg1 : i32, i32
  }
  func.func @transform_2(%arg0: i32, %arg1: i32) -> (i32, i32) {
    %c0_i32 = arith.constant 0 : i32
    %c0_i32_0 = arith.constant 0 : i32
    return %c0_i32, %arg1 : i32, i32
  }
  func.func @transform_3(%arg0: i32, %arg1: i32) -> (i32, i32) {
    %c0_i32 = arith.constant 0 : i32
    %c0_i32_0 = arith.constant 0 : i32
    return %arg1, %c0_i32 : i32, i32
  }
  func.func @transform_4(%arg0: i32, %arg1: i32) -> (i32, i32) {
    %c0_i32 = arith.constant 0 : i32
    %c0_i32_0 = arith.constant 0 : i32
    %c0_i32_1 = arith.constant 0 : i32
    return %c0_i32, %c0_i32_0 : i32, i32
  }
  func.func @transform_5(%arg0: i32, %arg1: i32) -> (i32, i32) {
    %c0_i32 = arith.constant 0 : i32
    %c0_i32_0 = arith.constant 0 : i32
    return %arg0, %c0_i32 : i32, i32
  }
}

module attributes {stable_mosaic.version = 11 : i64} {
  func.func @_mlp_kernel(%arg0: i32, %arg1: i32, %arg2: memref<16x32xf32, #tpu.memory_space<vmem>>, %arg3: memref<32x128xbf16, #tpu.memory_space<vmem>>, %arg4: memref<1x128xf32, #tpu.memory_space<vmem>>, %arg5: memref<128x128xbf16, #tpu.memory_space<vmem>>, %arg6: memref<1x128xf32, #tpu.memory_space<vmem>>, %arg7: memref<16x128xf32, #tpu.memory_space<vmem>>, %arg8: memref<16x128xf32, #tpu.memory_space<vmem>>) attributes {dimension_semantics = [#tpu.dimension_semantics<parallel>, #tpu.dimension_semantics<arbitrary>], iteration_bounds = array<i64: 1, 1>, scalar_prefetch = 0 : i64, scratch_operands = 1 : i64, tpu.core_type = #tpu.core_type<tc>, window_params = [{transform_indices = @transform_0, window_bounds = array<i64: 16, 32>}, {transform_indices = @transform_1, window_bounds = array<i64: 32, 128>}, {transform_indices = @transform_2, window_bounds = array<i64: 1, 128>}, {transform_indices = @transform_3, window_bounds = array<i64: 128, 128>}, {pipeline_mode = #tpu.pipeline_mode<synchronous>, transform_indices = @transform_4, window_bounds = array<i64: 1, 128>}, {transform_indices = @transform_5, window_bounds = array<i64: 16, 128>}]} {
    %c0_i32 = arith.constant 0 : i32
    %0 = arith.cmpi eq, %arg1, %c0_i32 : i32
    %1 = arith.extui %0 : i1 to i32
    %c0_i32_0 = arith.constant 0 : i32
    %2 = arith.cmpi ne, %1, %c0_i32_0 : i32
    scf.if %2 {
      %cst_18 = arith.constant 0.000000e+00 : f32
      %26 = vector.broadcast %cst_18 : f32 to vector<16x128xf32>
      %c0_19 = arith.constant 0 : index
      %c0_20 = arith.constant 0 : index
      %27 = vector.load %arg8[%c0_19, %c0_20] : memref<16x128xf32, #tpu.memory_space<vmem>>, vector<16x128xf32>
      tpu.vector_store %arg8[%c0_19, %c0_20], %26 {strides = array<i32>} : memref<16x128xf32, #tpu.memory_space<vmem>>, vector<16x128xf32>,
    } else {
    }
    %c0 = arith.constant 0 : index
    %c0_1 = arith.constant 0 : index
    %3 = vector.load %arg2[%c0, %c0_1] : memref<16x32xf32, #tpu.memory_space<vmem>>, vector<16x32xf32>
    %4 = arith.truncf %3 : vector<16x32xf32> to vector<16x32xbf16>
    %c0_2 = arith.constant 0 : index
    %c0_3 = arith.constant 0 : index
    %5 = vector.load %arg3[%c0_2, %c0_3] : memref<32x128xbf16, #tpu.memory_space<vmem>>, vector<32x128xbf16>
    %cst = arith.constant dense<0.000000e+00> : vector<16x128xf32>
    %6 = tpu.matmul %4, %5, %cst {dimension_numbers = #tpu.dot_dimension_numbers<[1], [0], [0], [1], [0, 0, 1, 1], [], []>} : vector<16x32xbf16>, vector<32x128xbf16>, vector<16x128xf32> -> vector<16x128xf32>
    %c0_4 = arith.constant 0 : index
    %c0_5 = arith.constant 0 : index
    %7 = vector.load %arg4[%c0_4, %c0_5] : memref<1x128xf32, #tpu.memory_space<vmem>>, vector<1x128xf32>
    %8 = vector.broadcast %7 : vector<1x128xf32> to vector<16x128xf32>
    %9 = arith.addf %6, %8 : vector<16x128xf32>
    %cst_6 = arith.constant 5.000000e-01 : f32
    %10 = vector.broadcast %cst_6 : f32 to vector<16x128xf32>
    %11 = arith.mulf %10, %9 : vector<16x128xf32>
    %12 = math.tanh %11 : vector<16x128xf32>
    %cst_7 = arith.constant 5.000000e-01 : f32
    %13 = vector.broadcast %cst_7 : f32 to vector<16x128xf32>
    %14 = arith.mulf %13, %12 : vector<16x128xf32>
    %cst_8 = arith.constant 5.000000e-01 : f32
    %15 = vector.broadcast %cst_8 : f32 to vector<16x128xf32>
    %16 = arith.addf %14, %15 : vector<16x128xf32>
    %c0_9 = arith.constant 0 : index
    %c0_10 = arith.constant 0 : index
    %17 = vector.load %arg8[%c0_9, %c0_10] : memref<16x128xf32, #tpu.memory_space<vmem>>, vector<16x128xf32>
    %18 = arith.truncf %16 : vector<16x128xf32> to vector<16x128xbf16>
    %c0_11 = arith.constant 0 : index
    %c0_12 = arith.constant 0 : index
    %19 = vector.load %arg5[%c0_11, %c0_12] : memref<128x128xbf16, #tpu.memory_space<vmem>>, vector<128x128xbf16>
    %cst_13 = arith.constant dense<0.000000e+00> : vector<16x128xf32>
    %20 = tpu.matmul %18, %19, %cst_13 {dimension_numbers = #tpu.dot_dimension_numbers<[1], [0], [0], [1], [0, 0, 1, 1], [], []>} : vector<16x128xbf16>, vector<128x128xbf16>, vector<16x128xf32> -> vector<16x128xf32>
    %21 = arith.addf %17, %20 : vector<16x128xf32>
    %c0_14 = arith.constant 0 : index
    %c0_15 = arith.constant 0 : index
    %22 = vector.load %arg8[%c0_14, %c0_15] : memref<16x128xf32, #tpu.memory_space<vmem>>, vector<16x128xf32>
    tpu.vector_store %arg8[%c0_14, %c0_15], %21 {strides = array<i32>} : memref<16x128xf32, #tpu.memory_space<vmem>>, vector<16x128xf32>,
    %c0_i32_16 = arith.constant 0 : i32
    %23 = arith.cmpi eq, %arg1, %c0_i32_16 : i32
    %24 = arith.extui %23 : i1 to i32
    %c0_i32_17 = arith.constant 0 : i32
    %25 = arith.cmpi ne, %24, %c0_i32_17 : i32
    scf.if %25 {
      %c0_18 = arith.constant 0 : index
      %c0_19 = arith.constant 0 : index
      %26 = vector.load %arg8[%c0_18, %c0_19] : memref<16x128xf32, #tpu.memory_space<vmem>>, vector<16x128xf32>
      %c0_20 = arith.constant 0 : index
      %c0_21 = arith.constant 0 : index
      %27 = vector.load %arg6[%c0_20, %c0_21] : memref<1x128xf32, #tpu.memory_space<vmem>>, vector<1x128xf32>
      %28 = vector.broadcast %27 : vector<1x128xf32> to vector<16x128xf32>
      %29 = arith.addf %26, %28 : vector<16x128xf32>
      %c0_22 = arith.constant 0 : index
      %c0_23 = arith.constant 0 : index
      %30 = vector.load %arg7[%c0_22, %c0_23] : memref<16x128xf32, #tpu.memory_space<vmem>>, vector<16x128xf32>
      tpu.vector_store %arg7[%c0_22, %c0_23], %29 {strides = array<i32>} : memref<16x128xf32, #tpu.memory_space<vmem>>, vector<16x128xf32>,
    } else {
    }
    return
  }
  func.func @transform_0(%arg0: i32, %arg1: i32) -> (i32, i32) {
    %c0_i32 = arith.constant 0 : i32
    %c0_i32_0 = arith.constant 0 : i32
    return %arg0, %c0_i32 : i32, i32
  }
  func.func @transform_1(%arg0: i32, %arg1: i32) -> (i32, i32) {
    %c0_i32 = arith.constant 0 : i32
    %c0_i32_0 = arith.constant 0 : i32
    return %c0_i32, %arg1 : i32, i32
  }
  func.func @transform_2(%arg0: i32, %arg1: i32) -> (i32, i32) {
    %c0_i32 = arith.constant 0 : i32
    %c0_i32_0 = arith.constant 0 : i32
    return %c0_i32, %arg1 : i32, i32
  }
  func.func @transform_3(%arg0: i32, %arg1: i32) -> (i32, i32) {
    %c0_i32 = arith.constant 0 : i32
    %c0_i32_0 = arith.constant 0 : i32
    return %arg1, %c0_i32 : i32, i32
  }
  func.func @transform_4(%arg0: i32, %arg1: i32) -> (i32, i32) {
    %c0_i32 = arith.constant 0 : i32
    %c0_i32_0 = arith.constant 0 : i32
    %c0_i32_1 = arith.constant 0 : i32
    return %c0_i32, %c0_i32_0 : i32, i32
  }
  func.func @transform_5(%arg0: i32, %arg1: i32) -> (i32, i32) {
    %c0_i32 = arith.constant 0 : i32
    %c0_i32_0 = arith.constant 0 : i32
    return %arg0, %c0_i32 : i32, i32
  }
}

</mosaic_0001>

<llo_original>
// kernel: tpu_custom_call.1
$region0: #{tpu_custom_call.1}
  #allocation0 [shape = 'u32[]', space=smem, size = 0x4, offset = 0x4, fixed_abs, tag = 'smem constant byte address 0x4 - core index']
  #allocation1 [shape = 'u32[144,128]{1,0:T(1,128)}', space=vmem, size = 0x12000, scoped, tag = 'internal scratch']
  #allocation2 [shape = 'f32[16,128]{1,0:T(8,128)}', space=vmem, size = 0x2000, scoped, tag = 'scratch operand']
  %s0 = inlined_call_operand.hbm [shape: f32[16,32], index: 0, kind: input, shape index: {}]
  %s1 = inlined_call_operand.hbm [shape: bf16[32,128], index: 1, kind: input, shape index: {}]
  %s2 = inlined_call_operand.vmem [shape: f32[1,128], index: 2, kind: input, shape index: {}]
  %s3 = inlined_call_operand.hbm [shape: bf16[128,128], index: 3, kind: input, shape index: {}]
  %s4 = inlined_call_operand.vmem [shape: f32[1,128], index: 4, kind: input, shape index: {}]
  %s5 = inlined_call_operand.hbm [shape: f32[16,128], index: 5, kind: output, shape index: {}]
  %s6 = sld [smem:[#allocation0]]
  $region50: #{tpu_custom_call.1} parent=0
    _
  %s8 = ssub.s32 1, %s6
  %s9 = scalar_select 0, %s8, %s6
  $region1: #{tpu_custom_call.1} parent=0
    #allocation3 [shape = 'u8[8192]{0}', space=vmem, size = 0x2000, scoped, tag = 'input window, operand 0, single buffered']
    #allocation4 [shape = 's32[1]{0}', space=sflag, size = 0x4, scoped, tag = 'scoped memory for tpu_custom_call.1']
    #allocation5 [shape = 's32[1]{0}', space=sflag, size = 0x4, scoped, tag = 'scoped memory for tpu_custom_call.1']
    #allocation6 [shape = 'u8[8192]{0}', space=vmem, size = 0x2000, scoped, tag = 'input window, operand 1, single buffered']
    #allocation7 [shape = 's32[1]{0}', space=sflag, size = 0x4, scoped, tag = 'scoped memory for tpu_custom_call.1']
    #allocation8 [shape = 'u8[32768]{0}', space=vmem, size = 0x8000, scoped, tag = 'input window, operand 3, single buffered']
    #allocation9 [shape = 'u8[8192]{0}', space=vmem, size = 0x2000, scoped, tag = 'output window, operand 0, single buffered']
    %10 = vsyncpa [#allocation4], 0
    %11 = vsyncpa [#allocation7], 0
    %12 = vsyncpa [#allocation5], 0
    // Predicated region
    $region2: #{tpu_custom_call.1} parent=1 // pred_check
      _
    $region3: #{tpu_custom_call.1} parent=1 // pred_check_branch
      %14 = sbr.rel (0) target = $region5
    $region4: #{tpu_custom_call.1} parent=1 // pred_region
      %s16 = ssub.s32 256, 256
      %17 = vsyncadd [#allocation4], %s16
      %s18 = sshll.u32 [#allocation3], 4
      %s19 = int_to_ptr.vmem [resolvable:$true] %s18
      %24 = dma.hbm_to_vmem [thread:$0]  %s0, 256, %s19, [#allocation4], 128, 128, 8
    $region5: #{tpu_custom_call.1} parent=1 // pred_fallthru
      _
    // Predicated region
    $region6: #{tpu_custom_call.1} parent=1 // pred_check
      _
    $region7: #{tpu_custom_call.1} parent=1 // pred_check_branch
      %26 = sbr.rel (0) target = $region9
    $region8: #{tpu_custom_call.1} parent=1 // pred_region
      %s28 = ssub.s32 256, 256
      %29 = vsyncadd [#allocation7], %s28
      %s30 = sshll.u32 [#allocation6], 4
      %s31 = int_to_ptr.vmem [resolvable:$true] %s30
      %36 = dma.hbm_to_vmem [thread:$0]  %s1, 256, %s31, [#allocation7], 64, 64, 4
    $region9: #{tpu_custom_call.1} parent=1 // pred_fallthru
      _
    // Predicated region
    $region10: #{tpu_custom_call.1} parent=1 // pred_check
      _
    $region11: #{tpu_custom_call.1} parent=1 // pred_check_branch
      %38 = sbr.rel (0) target = $region13
    $region12: #{tpu_custom_call.1} parent=1 // pred_region
      _
    $region13: #{tpu_custom_call.1} parent=1 // pred_fallthru
      _
    // Predicated region
    $region14: #{tpu_custom_call.1} parent=1 // pred_check
      _
    $region15: #{tpu_custom_call.1} parent=1 // pred_check_branch
      %40 = sbr.rel (0) target = $region17
    $region16: #{tpu_custom_call.1} parent=1 // pred_region
      %s42 = ssub.s32 1024, 1024
      %43 = vsyncadd [#allocation7], %s42
      %s44 = sshll.u32 [#allocation8], 4
      %s45 = int_to_ptr.vmem [resolvable:$true] %s44
      %50 = dma.hbm_to_vmem [thread:$0]  %s3, 1024, %s45, [#allocation7], 64, 64, 4
    $region17: #{tpu_custom_call.1} parent=1 // pred_fallthru
      _
    // Predicated region
    $region18: #{tpu_custom_call.1} parent=1 // pred_check
      _
    $region19: #{tpu_custom_call.1} parent=1 // pred_check_branch
      %52 = sbr.rel (0) target = $region21
    $region20: #{tpu_custom_call.1} parent=1 // pred_region
      _
    $region21: #{tpu_custom_call.1} parent=1 // pred_fallthru
      _
    // Predicated region
    $region22: #{tpu_custom_call.1} parent=1 // pred_check
      _
    $region23: #{tpu_custom_call.1} parent=1 // pred_check_branch
      %54 = sbr.rel (0) target = $region25
    $region24: #{tpu_custom_call.1} parent=1 // pred_region
      %55 = dma.done [#allocation4], 256
    $region25: #{tpu_custom_call.1} parent=1 // pred_fallthru
      _
    // Predicated region
    $region26: #{tpu_custom_call.1} parent=1 // pred_check
      _
    $region27: #{tpu_custom_call.1} parent=1 // pred_check_branch
      %57 = sbr.rel (0) target = $region29
    $region28: #{tpu_custom_call.1} parent=1 // pred_region
      %58 = dma.done [#allocation7], 256
    $region29: #{tpu_custom_call.1} parent=1 // pred_fallthru
      _
    // Predicated region
    $region30: #{tpu_custom_call.1} parent=1 // pred_check
      _
    $region31: #{tpu_custom_call.1} parent=1 // pred_check_branch
      %60 = sbr.rel (0) target = $region33
    $region32: #{tpu_custom_call.1} parent=1 // pred_region
      %61 = dma.done [#allocation7], 1024
    $region33: #{tpu_custom_call.1} parent=1 // pred_fallthru
      _
    %p63 = scmp.eq.s32.totalorder 0, 0
    // Predicated region
    $region34: #{tpu_custom_call.1} parent=1 // pred_check
      %p64 = pneg %p63
    $region35: #{tpu_custom_call.1} parent=1 // pred_check_branch
      %66 = sbr.rel (%p64) target = $region37
    $region36: #{tpu_custom_call.1} parent=1 // pred_region
      %67 = vst [vmem:[#allocation2] sm:$0xff] 0.0
      %68 = vst [vmem:[#allocation2 + $0x8] sm:$0xff] 0.0
    $region37: #{tpu_custom_call.1} parent=1 // pred_fallthru
      _
    %v69 = vld [vmem:[#allocation3] sm:$0xff]
    %v70 = vld [vmem:[#allocation3 + $0x8] sm:$0xff]
    %v71 = vpack.c.bf16 %v70, %v69
    %v72 = vld [vmem:[#allocation6] sm:$0xf]
    %v73 = vld [vmem:[#allocation6 + $0x4] sm:$0xf]
    %v74 = vld [vmem:[#allocation6 + $0x8] sm:$0xf]
    %v75 = vld [vmem:[#allocation6 + $0xc] sm:$0xf]
    %v76 = vld [vmem:[%s2] sm:$0x1]
    %v78 = vlaneseq
    %v79 = vshrl.u32 %v78, 7
    %v80 = vsub.s32 0, %v79
    %v81 = vrot.slane %v76, %v80
    %v87 = vunpack.c.l.b16 %v72
    %v88 = vunpack.c.l.b16 %v73
    %v89 = vunpack.c.l.b16 %v74
    %v90 = vunpack.c.l.b16 %v75
    %v91 = vpack.c.b16 %v88, %v87
    %v92 = vpack.c.b16 %v90, %v89
    %vm95 = vcmask 261120
    %v97 = vsel %vm95, %v71, 0
    %99 = vmatprep.subr.bf16.mxu0 0
    %100 = vmatpush1.bf16.msra.mxu0 %v91
    %101 = vmatprep.subr.bf16.mxu0 0
    %102 = vmatpush1.bf16.msra.mxu0 %v92
    %103 = vmatprep.subr.bf16.mxu0 0
    %104 = vmatpush1.bf16.msra.mxu0 0
    %105 = vmatprep.subr.bf16.mxu0 0
    %106 = vmatpush1.bf16.msra.mxu0 0
    %107 = vmatprep.subr.bf16.mxu0 0
    %108 = vmatpush1.bf16.msra.mxu0 0
    %109 = vmatprep.subr.bf16.mxu0 0
    %110 = vmatpush1.bf16.msra.mxu0 0
    %111 = vmatprep.subr.bf16.mxu0 0
    %112 = vmatpush1.bf16.msra.mxu0 0
    %113 = vmatprep.subr.bf16.mxu0 0
    %114 = vmatpush1.bf16.msra.mxu0 0
    %115 = vmatprep.subr.bf16.mxu0 0
    %116 = vmatpush1.bf16.msra.mxu0 0
    %117 = vmatprep.subr.bf16.mxu0 0
    %118 = vmatpush1.bf16.msra.mxu0 0
    %119 = vmatprep.subr.bf16.mxu0 0
    %120 = vmatpush1.bf16.msra.mxu0 0
    %121 = vmatprep.subr.bf16.mxu0 0
    %122 = vmatpush1.bf16.msra.mxu0 0
    %123 = vmatprep.subr.bf16.mxu0 0
    %124 = vmatpush1.bf16.msra.mxu0 0
    %125 = vmatprep.subr.bf16.mxu0 0
    %126 = vmatpush1.bf16.msra.mxu0 0
    %127 = vmatprep.subr.bf16.mxu0 0
    %128 = vmatpush1.bf16.msra.mxu0 0
    %129 = vmatprep.subr.bf16.mxu0 0
    %130 = vmatpush1.bf16.msra.mxu0 0
    %131 = vmatprep.mubr.bf16.mxu0 0
    %132 = vmatmul.mubr.bf16.gmra.mrb[0].mxu0 %v97
    %v133 = vpop.f32.mrb[0].mxu0
    %v134 = vadd.f32 %v81, %v133
    %v135 = vpop.f32.mrb[0].mxu0
    %v136 = vpop.f32.mrb[0].mxu0
    %v137 = vadd.f32 %v81, %v136
    %v138 = vpop.f32.mrb[0].mxu0
    %139 = vdwg.mxu0
    %v140 = vmul.f32 %v134, 0.5
    %v141 = vmul.f32 %v137, 0.5
    %v142 = vtanh.pop %v140
    %v143 = vtanh.pop %v141
    %v144 = vmul.f32 %v142, 0.5
    %v145 = vmul.f32 %v143, 0.5
    %v146 = vadd.f32 %v144, 0.5
    %v147 = vadd.f32 %v145, 0.5
    %v148 = vld [vmem:[#allocation2] sm:$0xff]
    %v149 = vld [vmem:[#allocation2 + $0x8] sm:$0xff]
    %v150 = vpack.c.bf16 %v147, %v146
    %v151 = vld [vmem:[#allocation8] sm:$0xf]
    %v152 = vld [vmem:[#allocation8 + $0x4] sm:$0xf]
    %v153 = vld [vmem:[#allocation8 + $0x8] sm:$0xf]
    %v154 = vld [vmem:[#allocation8 + $0xc] sm:$0xf]
    %v155 = vld [vmem:[#allocation8 + $0x10] sm:$0xf]
    %v156 = vld [vmem:[#allocation8 + $0x14] sm:$0xf]
    %v157 = vld [vmem:[#allocation8 + $0x18] sm:$0xf]
    %v158 = vld [vmem:[#allocation8 + $0x1c] sm:$0xf]
    %v159 = vld [vmem:[#allocation8 + $0x20] sm:$0xf]
    %v160 = vld [vmem:[#allocation8 + $0x24] sm:$0xf]
    %v161 = vld [vmem:[#allocation8 + $0x28] sm:$0xf]
    %v162 = vld [vmem:[#allocation8 + $0x2c] sm:$0xf]
    %v163 = vld [vmem:[#allocation8 + $0x30] sm:$0xf]
    %v164 = vld [vmem:[#allocation8 + $0x34] sm:$0xf]
    %v165 = vld [vmem:[#allocation8 + $0x38] sm:$0xf]
    %v166 = vld [vmem:[#allocation8 + $0x3c] sm:$0xf]
    %v183 = vunpack.c.l.b16 %v151
    %v184 = vunpack.c.l.b16 %v152
    %v185 = vunpack.c.l.b16 %v153
    %v186 = vunpack.c.l.b16 %v154
    %v187 = vunpack.c.l.b16 %v155
    %v188 = vunpack.c.l.b16 %v156
    %v189 = vunpack.c.l.b16 %v157
    %v190 = vunpack.c.l.b16 %v158
    %v191 = vunpack.c.l.b16 %v159
    %v192 = vunpack.c.l.b16 %v160
    %v193 = vunpack.c.l.b16 %v161
    %v194 = vunpack.c.l.b16 %v162
    %v195 = vunpack.c.l.b16 %v163
    %v196 = vunpack.c.l.b16 %v164
    %v197 = vunpack.c.l.b16 %v165
    %v198 = vunpack.c.l.b16 %v166
    %v199 = vpack.c.b16 %v184, %v183
    %v200 = vpack.c.b16 %v186, %v185
    %v201 = vpack.c.b16 %v188, %v187
    %v202 = vpack.c.b16 %v190, %v189
    %v203 = vpack.c.b16 %v192, %v191
    %v204 = vpack.c.b16 %v194, %v193
    %v205 = vpack.c.b16 %v196, %v195
    %v206 = vpack.c.b16 %v198, %v197
    %215 = vmatprep.subr.bf16.mxu0 0
    %216 = vmatpush1.bf16.msra.mxu0 %v199
    %217 = vmatprep.subr.bf16.mxu0 0
    %218 = vmatpush1.bf16.msra.mxu0 %v200
    %219 = vmatprep.subr.bf16.mxu0 0
    %220 = vmatpush1.bf16.msra.mxu0 %v201
    %221 = vmatprep.subr.bf16.mxu0 0
    %222 = vmatpush1.bf16.msra.mxu0 %v202
    %223 = vmatprep.subr.bf16.mxu0 0
    %224 = vmatpush1.bf16.msra.mxu0 %v203
    %225 = vmatprep.subr.bf16.mxu0 0
    %226 = vmatpush1.bf16.msra.mxu0 %v204
    %227 = vmatprep.subr.bf16.mxu0 0
    %228 = vmatpush1.bf16.msra.mxu0 %v205
    %229 = vmatprep.subr.bf16.mxu0 0
    %230 = vmatpush1.bf16.msra.mxu0 %v206
    %231 = vmatprep.subr.bf16.mxu0 0
    %232 = vmatpush1.bf16.msra.mxu0 0
    %233 = vmatprep.subr.bf16.mxu0 0
    %234 = vmatpush1.bf16.msra.mxu0 0
    %235 = vmatprep.subr.bf16.mxu0 0
    %236 = vmatpush1.bf16.msra.mxu0 0
    %237 = vmatprep.subr.bf16.mxu0 0
    %238 = vmatpush1.bf16.msra.mxu0 0
    %239 = vmatprep.subr.bf16.mxu0 0
    %240 = vmatpush1.bf16.msra.mxu0 0
    %241 = vmatprep.subr.bf16.mxu0 0
    %242 = vmatpush1.bf16.msra.mxu0 0
    %243 = vmatprep.subr.bf16.mxu0 0
    %244 = vmatpush1.bf16.msra.mxu0 0
    %245 = vmatprep.subr.bf16.mxu0 0
    %246 = vmatpush1.bf16.msra.mxu0 0
    %247 = vmatprep.mubr.bf16.mxu0 0
    %248 = vmatmul.mubr.bf16.gmra.mrb[0].mxu0 %v150
    %v249 = vpop.f32.mrb[0].mxu0
    %v250 = vadd.f32 0.0, %v249
    %v251 = vpop.f32.mrb[0].mxu0
    %v252 = vpop.f32.mrb[0].mxu0
    %v253 = vadd.f32 0.0, %v252
    %v254 = vpop.f32.mrb[0].mxu0
    %255 = vdwg.mxu0
    %v256 = vadd.f32 %v148, %v250
    %v257 = vadd.f32 %v149, %v253
    %258 = vst [vmem:[#allocation2] sm:$0xff] %v256
    %259 = vst [vmem:[#allocation2 + $0x8] sm:$0xff] %v257
    // Predicated region
    $region38: #{tpu_custom_call.1} parent=1 // pred_check
      %p260 = pneg %p63
    $region39: #{tpu_custom_call.1} parent=1 // pred_check_branch
      %262 = sbr.rel (%p260) target = $region41
    $region40: #{tpu_custom_call.1} parent=1 // pred_region
      %v263 = vld [vmem:[#allocation2] sm:$0xff]
      %v264 = vld [vmem:[#allocation2 + $0x8] sm:$0xff]
      %v265 = vld [vmem:[%s4] sm:$0x1]
      %v267 = vlaneseq
      %v268 = vshrl.u32 %v267, 7
      %v269 = vsub.s32 0, %v268
      %v270 = vrot.slane %v265, %v269
      %v272 = vadd.f32 %v263, %v270
      %v273 = vadd.f32 %v264, %v270
      %274 = vst [vmem:[#allocation9] sm:$0xff] %v272
      %275 = vst [vmem:[#allocation9 + $0x8] sm:$0xff] %v273
    $region41: #{tpu_custom_call.1} parent=1 // pred_fallthru
      _
    // Predicated region
    $region42: #{tpu_custom_call.1} parent=1 // pred_check
      _
    $region43: #{tpu_custom_call.1} parent=1 // pred_check_branch
      %277 = sbr.rel (0) target = $region45
    $region44: #{tpu_custom_call.1} parent=1 // pred_region
      %s279 = ssub.s32 256, 256
      %280 = vsyncadd [#allocation5], %s279
      %s281 = sshll.u32 [#allocation9], 4
      %s282 = int_to_ptr.vmem [resolvable:$true] %s281
      %287 = dma.vmem_to_hbm [thread:$0]  %s282, 256, %s5, [#allocation5], 128, 128, 8
    $region45: #{tpu_custom_call.1} parent=1 // pred_fallthru
      _
    // Predicated region
    $region46: #{tpu_custom_call.1} parent=1 // pred_check
      _
    $region47: #{tpu_custom_call.1} parent=1 // pred_check_branch
      %289 = sbr.rel (0) target = $region49
    $region48: #{tpu_custom_call.1} parent=1 // pred_region
      %290 = dma.done [#allocation5], 256
    $region49: #{tpu_custom_call.1} parent=1 // pred_fallthru
      _
    %291 = vsyncpa [#allocation4], 1
    %292 = vsyncpa [#allocation7], 1
    %293 = vsyncpa [#allocation5], 1

// kernel: tpu_custom_call.1
$region0: #{tpu_custom_call.1}
  #allocation0 [shape = 'u32[]', space=smem, size = 0x4, offset = 0x4, fixed_abs, tag = 'smem constant byte address 0x4 - core index']
  #allocation1 [shape = 'u32[144,128]{1,0:T(1,128)}', space=vmem, size = 0x12000, scoped, tag = 'internal scratch']
  #allocation2 [shape = 'f32[16,128]{1,0:T(8,128)}', space=vmem, size = 0x2000, scoped, tag = 'scratch operand']
  %s0 = inlined_call_operand.hbm [shape: f32[16,32], index: 0, kind: input, shape index: {}]
  %s1 = inlined_call_operand.hbm [shape: bf16[32,128], index: 1, kind: input, shape index: {}]
  %s2 = inlined_call_operand.vmem [shape: f32[1,128], index: 2, kind: input, shape index: {}]
  %s3 = inlined_call_operand.hbm [shape: bf16[128,128], index: 3, kind: input, shape index: {}]
  %s4 = inlined_call_operand.vmem [shape: f32[1,128], index: 4, kind: input, shape index: {}]
  %s5 = inlined_call_operand.hbm [shape: f32[16,128], index: 5, kind: output, shape index: {}]
  %s6 = sld [smem:[#allocation0]]
  $region50: #{tpu_custom_call.1} parent=0
    _
  %s8 = ssub.s32 1, %s6
  %s9 = scalar_select 0, %s8, %s6
  $region1: #{tpu_custom_call.1} parent=0
    #allocation3 [shape = 'u8[8192]{0}', space=vmem, size = 0x2000, scoped, tag = 'input window, operand 0, single buffered']
    #allocation4 [shape = 's32[1]{0}', space=sflag, size = 0x4, scoped, tag = 'scoped memory for tpu_custom_call.1']
    #allocation5 [shape = 's32[1]{0}', space=sflag, size = 0x4, scoped, tag = 'scoped memory for tpu_custom_call.1']
    #allocation6 [shape = 'u8[8192]{0}', space=vmem, size = 0x2000, scoped, tag = 'input window, operand 1, single buffered']
    #allocation7 [shape = 's32[1]{0}', space=sflag, size = 0x4, scoped, tag = 'scoped memory for tpu_custom_call.1']
    #allocation8 [shape = 'u8[32768]{0}', space=vmem, size = 0x8000, scoped, tag = 'input window, operand 3, single buffered']
    #allocation9 [shape = 'u8[8192]{0}', space=vmem, size = 0x2000, scoped, tag = 'output window, operand 0, single buffered']
    %10 = vsyncpa [#allocation4], 0
    %11 = vsyncpa [#allocation7], 0
    %12 = vsyncpa [#allocation5], 0
    // Predicated region
    $region2: #{tpu_custom_call.1} parent=1 // pred_check
      _
    $region3: #{tpu_custom_call.1} parent=1 // pred_check_branch
      %14 = sbr.rel (0) target = $region5
    $region4: #{tpu_custom_call.1} parent=1 // pred_region
      %s16 = ssub.s32 256, 256
      %17 = vsyncadd [#allocation4], %s16
      %s18 = sshll.u32 [#allocation3], 4
      %s19 = int_to_ptr.vmem [resolvable:$true] %s18
      %24 = dma.hbm_to_vmem [thread:$0]  %s0, 256, %s19, [#allocation4], 128, 128, 8
    $region5: #{tpu_custom_call.1} parent=1 // pred_fallthru
      _
    // Predicated region
    $region6: #{tpu_custom_call.1} parent=1 // pred_check
      _
    $region7: #{tpu_custom_call.1} parent=1 // pred_check_branch
      %26 = sbr.rel (0) target = $region9
    $region8: #{tpu_custom_call.1} parent=1 // pred_region
      %s28 = ssub.s32 256, 256
      %29 = vsyncadd [#allocation7], %s28
      %s30 = sshll.u32 [#allocation6], 4
      %s31 = int_to_ptr.vmem [resolvable:$true] %s30
      %36 = dma.hbm_to_vmem [thread:$0]  %s1, 256, %s31, [#allocation7], 64, 64, 4
    $region9: #{tpu_custom_call.1} parent=1 // pred_fallthru
      _
    // Predicated region
    $region10: #{tpu_custom_call.1} parent=1 // pred_check
      _
    $region11: #{tpu_custom_call.1} parent=1 // pred_check_branch
      %38 = sbr.rel (0) target = $region13
    $region12: #{tpu_custom_call.1} parent=1 // pred_region
      _
    $region13: #{tpu_custom_call.1} parent=1 // pred_fallthru
      _
    // Predicated region
    $region14: #{tpu_custom_call.1} parent=1 // pred_check
      _
    $region15: #{tpu_custom_call.1} parent=1 // pred_check_branch
      %40 = sbr.rel (0) target = $region17
    $region16: #{tpu_custom_call.1} parent=1 // pred_region
      %s42 = ssub.s32 1024, 1024
      %43 = vsyncadd [#allocation7], %s42
      %s44 = sshll.u32 [#allocation8], 4
      %s45 = int_to_ptr.vmem [resolvable:$true] %s44
      %50 = dma.hbm_to_vmem [thread:$0]  %s3, 1024, %s45, [#allocation7], 64, 64, 4
    $region17: #{tpu_custom_call.1} parent=1 // pred_fallthru
      _
    // Predicated region
    $region18: #{tpu_custom_call.1} parent=1 // pred_check
      _
    $region19: #{tpu_custom_call.1} parent=1 // pred_check_branch
      %52 = sbr.rel (0) target = $region21
    $region20: #{tpu_custom_call.1} parent=1 // pred_region
      _
    $region21: #{tpu_custom_call.1} parent=1 // pred_fallthru
      _
    // Predicated region
    $region22: #{tpu_custom_call.1} parent=1 // pred_check
      _
    $region23: #{tpu_custom_call.1} parent=1 // pred_check_branch
      %54 = sbr.rel (0) target = $region25
    $region24: #{tpu_custom_call.1} parent=1 // pred_region
      %55 = dma.done [#allocation4], 256
    $region25: #{tpu_custom_call.1} parent=1 // pred_fallthru
      _
    // Predicated region
    $region26: #{tpu_custom_call.1} parent=1 // pred_check
      _
    $region27: #{tpu_custom_call.1} parent=1 // pred_check_branch
      %57 = sbr.rel (0) target = $region29
    $region28: #{tpu_custom_call.1} parent=1 // pred_region
      %58 = dma.done [#allocation7], 256
    $region29: #{tpu_custom_call.1} parent=1 // pred_fallthru
      _
    // Predicated region
    $region30: #{tpu_custom_call.1} parent=1 // pred_check
      _
    $region31: #{tpu_custom_call.1} parent=1 // pred_check_branch
      %60 = sbr.rel (0) target = $region33
    $region32: #{tpu_custom_call.1} parent=1 // pred_region
      %61 = dma.done [#allocation7], 1024
    $region33: #{tpu_custom_call.1} parent=1 // pred_fallthru
      _
    %p63 = scmp.eq.s32.totalorder 0, 0
    // Predicated region
    $region34: #{tpu_custom_call.1} parent=1 // pred_check
      %p64 = pneg %p63
    $region35: #{tpu_custom_call.1} parent=1 // pred_check_branch
      %66 = sbr.rel (%p64) target = $region37
    $region36: #{tpu_custom_call.1} parent=1 // pred_region
      %67 = vst [vmem:[#allocation2] sm:$0xff] 0.0
      %68 = vst [vmem:[#allocation2 + $0x8] sm:$0xff] 0.0
    $region37: #{tpu_custom_call.1} parent=1 // pred_fallthru
      _
    %v69 = vld [vmem:[#allocation3] sm:$0xff]
    %v70 = vld [vmem:[#allocation3 + $0x8] sm:$0xff]
    %v71 = vpack.c.bf16 %v70, %v69
    %v72 = vld [vmem:[#allocation6] sm:$0xf]
    %v73 = vld [vmem:[#allocation6 + $0x4] sm:$0xf]
    %v74 = vld [vmem:[#allocation6 + $0x8] sm:$0xf]
    %v75 = vld [vmem:[#allocation6 + $0xc] sm:$0xf]
    %v76 = vld [vmem:[%s2] sm:$0x1]
    %v78 = vlaneseq
    %v79 = vshrl.u32 %v78, 7
    %v80 = vsub.s32 0, %v79
    %v81 = vrot.slane %v76, %v80
    %v87 = vunpack.c.l.b16 %v72
    %v88 = vunpack.c.l.b16 %v73
    %v89 = vunpack.c.l.b16 %v74
    %v90 = vunpack.c.l.b16 %v75
    %v91 = vpack.c.b16 %v88, %v87
    %v92 = vpack.c.b16 %v90, %v89
    %vm95 = vcmask 261120
    %v97 = vsel %vm95, %v71, 0
    %99 = vmatprep.subr.bf16.mxu0 0
    %100 = vmatpush1.bf16.msra.mxu0 %v91
    %101 = vmatprep.subr.bf16.mxu0 0
    %102 = vmatpush1.bf16.msra.mxu0 %v92
    %103 = vmatprep.subr.bf16.mxu0 0
    %104 = vmatpush1.bf16.msra.mxu0 0
    %105 = vmatprep.subr.bf16.mxu0 0
    %106 = vmatpush1.bf16.msra.mxu0 0
    %107 = vmatprep.subr.bf16.mxu0 0
    %108 = vmatpush1.bf16.msra.mxu0 0
    %109 = vmatprep.subr.bf16.mxu0 0
    %110 = vmatpush1.bf16.msra.mxu0 0
    %111 = vmatprep.subr.bf16.mxu0 0
    %112 = vmatpush1.bf16.msra.mxu0 0
    %113 = vmatprep.subr.bf16.mxu0 0
    %114 = vmatpush1.bf16.msra.mxu0 0
    %115 = vmatprep.subr.bf16.mxu0 0
    %116 = vmatpush1.bf16.msra.mxu0 0
    %117 = vmatprep.subr.bf16.mxu0 0
    %118 = vmatpush1.bf16.msra.mxu0 0
    %119 = vmatprep.subr.bf16.mxu0 0
    %120 = vmatpush1.bf16.msra.mxu0 0
    %121 = vmatprep.subr.bf16.mxu0 0
    %122 = vmatpush1.bf16.msra.mxu0 0
    %123 = vmatprep.subr.bf16.mxu0 0
    %124 = vmatpush1.bf16.msra.mxu0 0
    %125 = vmatprep.subr.bf16.mxu0 0
    %126 = vmatpush1.bf16.msra.mxu0 0
    %127 = vmatprep.subr.bf16.mxu0 0
    %128 = vmatpush1.bf16.msra.mxu0 0
    %129 = vmatprep.subr.bf16.mxu0 0
    %130 = vmatpush1.bf16.msra.mxu0 0
    %131 = vmatprep.mubr.bf16.mxu0 0
    %132 = vmatmul.mubr.bf16.gmra.mrb[0].mxu0 %v97
    %v133 = vpop.f32.mrb[0].mxu0
    %v134 = vadd.f32 %v81, %v133
    %v135 = vpop.f32.mrb[0].mxu0
    %v136 = vpop.f32.mrb[0].mxu0
    %v137 = vadd.f32 %v81, %v136
    %v138 = vpop.f32.mrb[0].mxu0
    %139 = vdwg.mxu0
    %v140 = vmul.f32 %v134, 0.5
    %v141 = vmul.f32 %v137, 0.5
    %v142 = vtanh.pop %v140
    %v143 = vtanh.pop %v141
    %v144 = vmul.f32 %v142, 0.5
    %v145 = vmul.f32 %v143, 0.5
    %v146 = vadd.f32 %v144, 0.5
    %v147 = vadd.f32 %v145, 0.5
    %v148 = vld [vmem:[#allocation2] sm:$0xff]
    %v149 = vld [vmem:[#allocation2 + $0x8] sm:$0xff]
    %v150 = vpack.c.bf16 %v147, %v146
    %v151 = vld [vmem:[#allocation8] sm:$0xf]
    %v152 = vld [vmem:[#allocation8 + $0x4] sm:$0xf]
    %v153 = vld [vmem:[#allocation8 + $0x8] sm:$0xf]
    %v154 = vld [vmem:[#allocation8 + $0xc] sm:$0xf]
    %v155 = vld [vmem:[#allocation8 + $0x10] sm:$0xf]
    %v156 = vld [vmem:[#allocation8 + $0x14] sm:$0xf]
    %v157 = vld [vmem:[#allocation8 + $0x18] sm:$0xf]
    %v158 = vld [vmem:[#allocation8 + $0x1c] sm:$0xf]
    %v159 = vld [vmem:[#allocation8 + $0x20] sm:$0xf]
    %v160 = vld [vmem:[#allocation8 + $0x24] sm:$0xf]
    %v161 = vld [vmem:[#allocation8 + $0x28] sm:$0xf]
    %v162 = vld [vmem:[#allocation8 + $0x2c] sm:$0xf]
    %v163 = vld [vmem:[#allocation8 + $0x30] sm:$0xf]
    %v164 = vld [vmem:[#allocation8 + $0x34] sm:$0xf]
    %v165 = vld [vmem:[#allocation8 + $0x38] sm:$0xf]
    %v166 = vld [vmem:[#allocation8 + $0x3c] sm:$0xf]
    %v183 = vunpack.c.l.b16 %v151
    %v184 = vunpack.c.l.b16 %v152
    %v185 = vunpack.c.l.b16 %v153
    %v186 = vunpack.c.l.b16 %v154
    %v187 = vunpack.c.l.b16 %v155
    %v188 = vunpack.c.l.b16 %v156
    %v189 = vunpack.c.l.b16 %v157
    %v190 = vunpack.c.l.b16 %v158
    %v191 = vunpack.c.l.b16 %v159
    %v192 = vunpack.c.l.b16 %v160
    %v193 = vunpack.c.l.b16 %v161
    %v194 = vunpack.c.l.b16 %v162
    %v195 = vunpack.c.l.b16 %v163
    %v196 = vunpack.c.l.b16 %v164
    %v197 = vunpack.c.l.b16 %v165
    %v198 = vunpack.c.l.b16 %v166
    %v199 = vpack.c.b16 %v184, %v183
    %v200 = vpack.c.b16 %v186, %v185
    %v201 = vpack.c.b16 %v188, %v187
    %v202 = vpack.c.b16 %v190, %v189
    %v203 = vpack.c.b16 %v192, %v191
    %v204 = vpack.c.b16 %v194, %v193
    %v205 = vpack.c.b16 %v196, %v195
    %v206 = vpack.c.b16 %v198, %v197
    %215 = vmatprep.subr.bf16.mxu0 0
    %216 = vmatpush1.bf16.msra.mxu0 %v199
    %217 = vmatprep.subr.bf16.mxu0 0
    %218 = vmatpush1.bf16.msra.mxu0 %v200
    %219 = vmatprep.subr.bf16.mxu0 0
    %220 = vmatpush1.bf16.msra.mxu0 %v201
    %221 = vmatprep.subr.bf16.mxu0 0
    %222 = vmatpush1.bf16.msra.mxu0 %v202
    %223 = vmatprep.subr.bf16.mxu0 0
    %224 = vmatpush1.bf16.msra.mxu0 %v203
    %225 = vmatprep.subr.bf16.mxu0 0
    %226 = vmatpush1.bf16.msra.mxu0 %v204
    %227 = vmatprep.subr.bf16.mxu0 0
    %228 = vmatpush1.bf16.msra.mxu0 %v205
    %229 = vmatprep.subr.bf16.mxu0 0
    %230 = vmatpush1.bf16.msra.mxu0 %v206
    %231 = vmatprep.subr.bf16.mxu0 0
    %232 = vmatpush1.bf16.msra.mxu0 0
    %233 = vmatprep.subr.bf16.mxu0 0
    %234 = vmatpush1.bf16.msra.mxu0 0
    %235 = vmatprep.subr.bf16.mxu0 0
    %236 = vmatpush1.bf16.msra.mxu0 0
    %237 = vmatprep.subr.bf16.mxu0 0
    %238 = vmatpush1.bf16.msra.mxu0 0
    %239 = vmatprep.subr.bf16.mxu0 0
    %240 = vmatpush1.bf16.msra.mxu0 0
    %241 = vmatprep.subr.bf16.mxu0 0
    %242 = vmatpush1.bf16.msra.mxu0 0
    %243 = vmatprep.subr.bf16.mxu0 0
    %244 = vmatpush1.bf16.msra.mxu0 0
    %245 = vmatprep.subr.bf16.mxu0 0
    %246 = vmatpush1.bf16.msra.mxu0 0
    %247 = vmatprep.mubr.bf16.mxu0 0
    %248 = vmatmul.mubr.bf16.gmra.mrb[0].mxu0 %v150
    %v249 = vpop.f32.mrb[0].mxu0
    %v250 = vadd.f32 0.0, %v249
    %v251 = vpop.f32.mrb[0].mxu0
    %v252 = vpop.f32.mrb[0].mxu0
    %v253 = vadd.f32 0.0, %v252
    %v254 = vpop.f32.mrb[0].mxu0
    %255 = vdwg.mxu0
    %v256 = vadd.f32 %v148, %v250
    %v257 = vadd.f32 %v149, %v253
    %258 = vst [vmem:[#allocation2] sm:$0xff] %v256
    %259 = vst [vmem:[#allocation2 + $0x8] sm:$0xff] %v257
    // Predicated region
    $region38: #{tpu_custom_call.1} parent=1 // pred_check
      %p260 = pneg %p63
    $region39: #{tpu_custom_call.1} parent=1 // pred_check_branch
      %262 = sbr.rel (%p260) target = $region41
    $region40: #{tpu_custom_call.1} parent=1 // pred_region
      %v263 = vld [vmem:[#allocation2] sm:$0xff]
      %v264 = vld [vmem:[#allocation2 + $0x8] sm:$0xff]
      %v265 = vld [vmem:[%s4] sm:$0x1]
      %v267 = vlaneseq
      %v268 = vshrl.u32 %v267, 7
      %v269 = vsub.s32 0, %v268
      %v270 = vrot.slane %v265, %v269
      %v272 = vadd.f32 %v263, %v270
      %v273 = vadd.f32 %v264, %v270
      %274 = vst [vmem:[#allocation9] sm:$0xff] %v272
      %275 = vst [vmem:[#allocation9 + $0x8] sm:$0xff] %v273
    $region41: #{tpu_custom_call.1} parent=1 // pred_fallthru
      _
    // Predicated region
    $region42: #{tpu_custom_call.1} parent=1 // pred_check
      _
    $region43: #{tpu_custom_call.1} parent=1 // pred_check_branch
      %277 = sbr.rel (0) target = $region45
    $region44: #{tpu_custom_call.1} parent=1 // pred_region
      %s279 = ssub.s32 256, 256
      %280 = vsyncadd [#allocation5], %s279
      %s281 = sshll.u32 [#allocation9], 4
      %s282 = int_to_ptr.vmem [resolvable:$true] %s281
      %287 = dma.vmem_to_hbm [thread:$0]  %s282, 256, %s5, [#allocation5], 128, 128, 8
    $region45: #{tpu_custom_call.1} parent=1 // pred_fallthru
      _
    // Predicated region
    $region46: #{tpu_custom_call.1} parent=1 // pred_check
      _
    $region47: #{tpu_custom_call.1} parent=1 // pred_check_branch
      %289 = sbr.rel (0) target = $region49
    $region48: #{tpu_custom_call.1} parent=1 // pred_region
      %290 = dma.done [#allocation5], 256
    $region49: #{tpu_custom_call.1} parent=1 // pred_fallthru
      _
    %291 = vsyncpa [#allocation4], 1
    %292 = vsyncpa [#allocation7], 1
    %293 = vsyncpa [#allocation5], 1

</llo_original>
